<compile_context>
chip_gen: v6e
topology: v6e:2x2x1
jax: 0.10.0
libtpu: 0.0.40
codegen_flags: <defaults>
</compile_context>

<pallas_src>
import jax
import jax.numpy as jnp
from jax.experimental import pallas as pl
from jax.experimental.pallas import tpu as pltpu


def _vmem_capacity_bytes():
    """Per-TensorCore VMEM capacity; conservative fallback is v7x's 64 MiB."""
    try:
        info = pltpu.get_tpu_info()
        cap = getattr(info, "vmem_capacity_bytes", None)
        if cap:
            return int(cap)
    except Exception:
        pass
    return 64 * 1024 * 1024


def _pick_tile_rows(batch_rows, feat_dim, itemsize, vmem_cap):
    """Batch-tile rows: multiple of 8, sized so the double-buffered streaming
    inputs (2 inputs x 2 buffers) plus the lane-padded narrow buffers fit a
    per-generation budget (~24 MiB on 128 MiB parts, ~21 MiB on v7x)."""
    input_budget = min(24 * 1024 * 1024, vmem_cap // 3)
    per_row_stream = 2 * 2 * feat_dim * itemsize          # o1 + o2, double-buffered
    per_row_narrow = 2 * 512 + 512                        # label blocks (x2) + acc scratch,
                                                          # lane-padded (rows,1) -> 512 B/row
    tile = input_budget // max(per_row_stream + per_row_narrow, 1)
    tile = int(max(8, min(8192, tile)))
    tile -= tile % 8
    # Never exceed the (8-aligned) batch so no block is larger than the array.
    tile = min(tile, max(8, (batch_rows // 8) * 8))
    return max(8, tile)


def _make_kernel(margin, true_b, tile_rows, steps_per_split):
    margin = float(margin)

    def kernel(o1_ref, o2_ref, lbl_ref, out_ref, acc_ref):
        c = pl.program_id(0)      # megacore split ("parallel")
        i = pl.program_id(1)      # batch-block step within the split ("arbitrary")

        @pl.when(i == 0)
        def _init():
            acc_ref[...] = jnp.zeros_like(acc_ref)

        # Blocks arrive in their native dtype; upcast once in VMEM.
        o1 = o1_ref[...].astype(jnp.float32)                   # (TB, D)
        o2 = o2_ref[...].astype(jnp.float32)
        diff = o1 - o2
        dist = jnp.sum(diff * diff, axis=1, keepdims=True)     # (TB, 1) squared L2

        lbl = lbl_ref[...].astype(jnp.float32)                 # (TB, 1)
        hinge = jnp.maximum(margin - dist, 0.0)                # clamp(min=0)
        per_ex = (1.0 - lbl) * dist + lbl * hinge              # (TB, 1)

        # Logical (unclamped) global block index for this step.
        gblk = c * steps_per_split + i
        needs_mask = (gblk + 1) * tile_rows > true_b

        # Fast path: fully-valid block, plain vector accumulate.
        @pl.when(jnp.logical_not(needs_mask))
        def _acc_full():
            acc_ref[...] += per_ex

        # Ragged / overflow block: zero the rows past the true batch
        # (select is safe even against NaN garbage in the OOB region).
        @pl.when(needs_mask)
        def _acc_masked():
            row = gblk * tile_rows + jax.lax.broadcasted_iota(
                jnp.int32, (tile_rows, 1), 0)
            acc_ref[...] += jnp.where(row < true_b, per_ex, 0.0)

        # One cross-sublane reduce per core, one tiny writeback per core.
        @pl.when(i == steps_per_split - 1)
        def _finalize():
            out_ref[...] = jnp.sum(acc_ref[...], keepdims=True)

    return kernel


def contrastive_loss(output1, output2, label, margin, tile_rows=None):
    """Pallas TPU implementation of ContrastiveLoss.forward.

    output1, output2: (B, D) float arrays (any float dtype; math is done in f32)
    label:            (B,) or (B, 1) array (0 = similar, 1 = dissimilar)
    margin:           python float (static)
    Returns a scalar float32 loss.
    """
    batch, feat_dim = output1.shape
    assert output2.shape == (batch, feat_dim)
    label = jnp.reshape(label, (batch, 1))

    # Only pad when the batch is smaller than a single 8-row sublane tile
    # (tiny copy); ragged batches are otherwise handled purely in-kernel,
    # with no full-array jnp.pad copy of the streamed inputs.
    if batch < 8:
        pad = 8 - batch
        output1 = jnp.pad(output1, ((0, pad), (0, 0)))
        output2 = jnp.pad(output2, ((0, pad), (0, 0)))
        label = jnp.pad(label, ((0, pad), (0, 0)))
    b_rows = output1.shape[0]

    itemsize = max(jnp.dtype(output1.dtype).itemsize,
                   jnp.dtype(output2.dtype).itemsize)
    vmem_cap = _vmem_capacity_bytes()
    if tile_rows is None:
        tile_rows = _pick_tile_rows(b_rows, feat_dim, itemsize, vmem_cap)
    tile_rows = max(8, int(tile_rows) - int(tile_rows) % 8)
    tile_rows = min(tile_rows, max(8, (b_rows // 8) * 8))

    # TODO(synk): for very large feat_dim on v7x (64 MiB VMEM), add a second
    # reduction grid axis over D instead of shrinking tile_rows toward 8.

    n_blocks = pl.cdiv(b_rows, tile_rows)
    # Megacore: split batch blocks across 2 TensorCores on v7x via a leading
    # "parallel" axis; on 1-TC chips this is just two sequential outer passes.
    num_splits = 2 if n_blocks >= 2 else 1
    steps = pl.cdiv(n_blocks, num_splits)
    last_blk = n_blocks - 1

    def row_block(c, i):
        # Clamp so overflow steps (from rounding n_blocks up to num_splits*steps)
        # re-read the last valid block instead of DMA-ing fully out of bounds;
        # the in-kernel mask zeroes their contribution.
        return (jnp.minimum(c * steps + i, last_blk), 0)

    per_row_stream = 2 * 2 * feat_dim * itemsize
    needed = tile_rows * (per_row_stream + 1536) + (2 << 20)
    vmem_limit = int(min(vmem_cap * 3 // 4, max(32 * 1024 * 1024, needed)))

    partial = pl.pallas_call(
        _make_kernel(margin, batch, tile_rows, steps),
        out_shape=jax.ShapeDtypeStruct((num_splits, 1), jnp.float32),
        grid=(num_splits, steps),
        in_specs=[
            pl.BlockSpec((tile_rows, feat_dim), row_block),
            pl.BlockSpec((tile_rows, feat_dim), row_block),
            pl.BlockSpec((tile_rows, 1), row_block),
        ],
        # One (1,1) partial-sum block per split; resident across the inner axis.
        out_specs=pl.BlockSpec((1, 1), lambda c, i: (c, 0)),
        scratch_shapes=[pltpu.VMEM((tile_rows, 1), jnp.float32)],
        compiler_params=pltpu.CompilerParams(
            dimension_semantics=("parallel", "arbitrary"),
            vmem_limit_bytes=vmem_limit,
        ),
    )(output1, output2, label)

    # Per-core partial sums -> mean over the true batch size (in the wrapper,
    # so the parallel splits never share an accumulator).
    return jnp.sum(partial) / jnp.float32(batch)


def _reference(output1, output2, label, margin):
    o1 = output1.astype(jnp.float32)
    o2 = output2.astype(jnp.float32)
    d = jnp.sum((o1 - o2) ** 2, axis=1)
    lbl = jnp.reshape(label, (-1,)).astype(jnp.float32)
    return jnp.mean((1.0 - lbl) * d + lbl * jnp.maximum(margin - d, 0.0))


if __name__ == "__main__":
    key = jax.random.PRNGKey(0)
    k1, k2, k3, k4, k5, k6 = jax.random.split(key, 6)
    margin = 2.0

    # Case 1: small canonical shape, single block.
    B, D = 8, 32
    output1 = jax.random.normal(k1, (B, D), dtype=jnp.float32)
    output2 = jax.random.normal(k2, (B, D), dtype=jnp.float32)
    label = jax.random.bernoulli(k3, 0.5, (B,)).astype(jnp.float32)

    loss = jax.block_until_ready(contrastive_loss(output1, output2, label, margin))
    ref = _reference(output1, output2, label, margin)
    assert jnp.allclose(loss, ref, rtol=1e-5, atol=1e-5), (loss, ref)

    # Case 2: ragged batch with a forced small tile -> exercises the 2-way
    # split grid, accumulation, clamped overflow block and in-kernel masking
    # (no wrapper padding of the inputs).
    B2, D2 = 20, 160
    o1b = jax.random.normal(k4, (B2, D2), dtype=jnp.float32)
    o2b = jax.random.normal(k5, (B2, D2), dtype=jnp.float32)
    lblb = jax.random.bernoulli(k6, 0.5, (B2,)).astype(jnp.float32)

    loss2 = jax.block_until_ready(
        contrastive_loss(o1b, o2b, lblb, margin, tile_rows=8))
    ref2 = _reference(o1b, o2b, lblb, margin)
    assert jnp.allclose(loss2, ref2, rtol=1e-5, atol=1e-5), (loss2, ref2)

    print("KERNEL_OK")
</pallas_src>

<mosaic_0001>
module attributes {stable_mosaic.version = 11 : i64} {
  func.func @kernel(%arg0: i32, %arg1: i32, %arg2: memref<8x32xf32, #tpu.memory_space<vmem>>, %arg3: memref<8x32xf32, #tpu.memory_space<vmem>>, %arg4: memref<8x1xf32, #tpu.memory_space<vmem>>, %arg5: memref<1x1xf32, #tpu.memory_space<vmem>>, %arg6: memref<8x1xf32, #tpu.memory_space<vmem>>) attributes {dimension_semantics = [#tpu.dimension_semantics<parallel>, #tpu.dimension_semantics<arbitrary>], iteration_bounds = array<i64: 1, 1>, scalar_prefetch = 0 : i64, scratch_operands = 1 : i64, tpu.core_type = #tpu.core_type<tc>, window_params = [{transform_indices = @transform_0, window_bounds = array<i64: 8, 32>}, {transform_indices = @transform_1, window_bounds = array<i64: 8, 32>}, {transform_indices = @transform_2, window_bounds = array<i64: 8, 1>}, {transform_indices = @transform_3, window_bounds = array<i64: 1, 1>}]} {
    %c0_i32 = arith.constant 0 : i32
    %0 = arith.cmpi eq, %arg1, %c0_i32 : i32
    %1 = arith.extui %0 : i1 to i32
    %c0_i32_0 = arith.constant 0 : i32
    %2 = arith.cmpi ne, %1, %c0_i32_0 : i32
    scf.if %2 {
      %cst_15 = arith.constant 0.000000e+00 : f32
      %32 = vector.broadcast %cst_15 : f32 to vector<8x1xf32>
      %c0_16 = arith.constant 0 : index
      %c0_17 = arith.constant 0 : index
      %33 = vector.load %arg6[%c0_16, %c0_17] : memref<8x1xf32, #tpu.memory_space<vmem>>, vector<8x1xf32>
      tpu.vector_store %arg6[%c0_16, %c0_17], %32 {strides = array<i32>} : memref<8x1xf32, #tpu.memory_space<vmem>>, vector<8x1xf32>,
    } else {
    }
    %c0 = arith.constant 0 : index
    %c0_1 = arith.constant 0 : index
    %3 = vector.load %arg2[%c0, %c0_1] : memref<8x32xf32, #tpu.memory_space<vmem>>, vector<8x32xf32>
    %c0_2 = arith.constant 0 : index
    %c0_3 = arith.constant 0 : index
    %4 = vector.load %arg3[%c0_2, %c0_3] : memref<8x32xf32, #tpu.memory_space<vmem>>, vector<8x32xf32>
    %5 = arith.subf %3, %4 : vector<8x32xf32>
    %6 = arith.mulf %5, %5 : vector<8x32xf32>
    %cst = arith.constant dense<0.000000e+00> : vector<8xf32>
    %7 = vector.multi_reduction <add>, %6, %cst [1] : vector<8x32xf32> to vector<8xf32>
    %8 = vector.shape_cast %7 : vector<8xf32> to vector<8x1xf32>
    %c0_4 = arith.constant 0 : index
    %c0_5 = arith.constant 0 : index
    %9 = vector.load %arg4[%c0_4, %c0_5] : memref<8x1xf32, #tpu.memory_space<vmem>>, vector<8x1xf32>
    %cst_6 = arith.constant 2.000000e+00 : f32
    %10 = vector.broadcast %cst_6 : f32 to vector<8x1xf32>
    %11 = arith.subf %10, %8 : vector<8x1xf32>
    %cst_7 = arith.constant 0.000000e+00 : f32
    %12 = vector.broadcast %cst_7 : f32 to vector<8x1xf32>
    %13 = arith.maximumf %11, %12 : vector<8x1xf32>
    %cst_8 = arith.constant 1.000000e+00 : f32
    %14 = vector.broadcast %cst_8 : f32 to vector<8x1xf32>
    %15 = arith.subf %14, %9 : vector<8x1xf32>
    %16 = arith.mulf %15, %8 : vector<8x1xf32>
    %17 = arith.mulf %9, %13 : vector<8x1xf32>
    %18 = arith.addf %16, %17 : vector<8x1xf32>
    %c1_i32 = arith.constant 1 : i32
    %19 = arith.muli %arg0, %c1_i32 : i32
    %20 = arith.addi %19, %arg1 : i32
    %c1_i32_9 = arith.constant 1 : i32
    %21 = arith.addi %20, %c1_i32_9 : i32
    %c8_i32 = arith.constant 8 : i32
    %22 = arith.muli %21, %c8_i32 : i32
    %c8_i32_10 = arith.constant 8 : i32
    %23 = arith.cmpi sgt, %22, %c8_i32_10 : i32
    %true = arith.constant true
    %24 = arith.xori %23, %true : i1
    %25 = arith.extui %24 : i1 to i32
    %c0_i32_11 = arith.constant 0 : i32
    %26 = arith.cmpi ne, %25, %c0_i32_11 : i32
    scf.if %26 {
      %c0_15 = arith.constant 0 : index
      %c0_16 = arith.constant 0 : index
      %32 = vector.load %arg6[%c0_15, %c0_16] : memref<8x1xf32, #tpu.memory_space<vmem>>, vector<8x1xf32>
      %33 = arith.addf %32, %18 : vector<8x1xf32>
      %c0_17 = arith.constant 0 : index
      %c0_18 = arith.constant 0 : index
      %34 = vector.load %arg6[%c0_17, %c0_18] : memref<8x1xf32, #tpu.memory_space<vmem>>, vector<8x1xf32>
      tpu.vector_store %arg6[%c0_17, %c0_18], %33 {strides = array<i32>} : memref<8x1xf32, #tpu.memory_space<vmem>>, vector<8x1xf32>,
    } else {
    }
    %27 = arith.extui %23 : i1 to i32
    %c0_i32_12 = arith.constant 0 : i32
    %28 = arith.cmpi ne, %27, %c0_i32_12 : i32
    scf.if %28 {
      %c8_i32_15 = arith.constant 8 : i32
      %32 = arith.muli %20, %c8_i32_15 : i32
      %33 = tpu.iota {dimensions = array<i32: 0>} : vector<8x1xi32>
      %34 = vector.broadcast %32 : i32 to vector<8x1xi32>
      %35 = arith.addi %34, %33 : vector<8x1xi32>
      %c0_16 = arith.constant 0 : index
      %c0_17 = arith.constant 0 : index
      %36 = vector.load %arg6[%c0_16, %c0_17] : memref<8x1xf32, #tpu.memory_space<vmem>>, vector<8x1xf32>
      %c8_i32_18 = arith.constant 8 : i32
      %37 = vector.broadcast %c8_i32_18 : i32 to vector<8x1xi32>
      %38 = arith.cmpi slt, %35, %37 : vector<8x1xi32>
      %cst_19 = arith.constant 0.000000e+00 : f32
      %39 = vector.broadcast %cst_19 : f32 to vector<8x1xf32>
      %40 = arith.select %38, %18, %39 : vector<8x1xi1>, vector<8x1xf32>
      %41 = arith.addf %36, %40 : vector<8x1xf32>
      %c0_20 = arith.constant 0 : index
      %c0_21 = arith.constant 0 : index
      %42 = vector.load %arg6[%c0_20, %c0_21] : memref<8x1xf32, #tpu.memory_space<vmem>>, vector<8x1xf32>
      tpu.vector_store %arg6[%c0_20, %c0_21], %41 {strides = array<i32>} : memref<8x1xf32, #tpu.memory_space<vmem>>, vector<8x1xf32>,
    } else {
    }
    %c0_i32_13 = arith.constant 0 : i32
    %29 = arith.cmpi eq, %arg1, %c0_i32_13 : i32
    %30 = arith.extui %29 : i1 to i32
    %c0_i32_14 = arith.constant 0 : i32
    %31 = arith.cmpi ne, %30, %c0_i32_14 : i32
    scf.if %31 {
      %c0_15 = arith.constant 0 : index
      %c0_16 = arith.constant 0 : index
      %32 = vector.load %arg6[%c0_15, %c0_16] : memref<8x1xf32, #tpu.memory_space<vmem>>, vector<8x1xf32>
      %33 = vector.shape_cast %32 : vector<8x1xf32> to vector<1x8x1xf32>
      %cst_17 = arith.constant dense<0.000000e+00> : vector<1xf32>
      %34 = vector.multi_reduction <add>, %33, %cst_17 [1, 2] : vector<1x8x1xf32> to vector<1xf32>
      %35 = vector.shape_cast %34 : vector<1xf32> to vector<1x1x1xf32>
      %36 = vector.extract %35[0, 0, 0] : f32 from vector<1x1x1xf32>
      %37 = vector.broadcast %36 : f32 to vector<1x1xf32>
      %c0_18 = arith.constant 0 : index
      %c0_19 = arith.constant 0 : index
      %38 = vector.load %arg5[%c0_18, %c0_19] : memref<1x1xf32, #tpu.memory_space<vmem>>, vector<1x1xf32>
      tpu.vector_store %arg5[%c0_18, %c0_19], %37 {strides = array<i32>} : memref<1x1xf32, #tpu.memory_space<vmem>>, vector<1x1xf32>,
    } else {
    }
    return
  }
  func.func @transform_0(%arg0: i32, %arg1: i32) -> (i32, i32) {
    %c1_i32 = arith.constant 1 : i32
    %0 = arith.muli %arg0, %c1_i32 : i32
    %1 = arith.addi %0, %arg1 : i32
    %c0_i32 = arith.constant 0 : i32
    %2 = arith.minsi %1, %c0_i32 : i32
    %c0_i32_0 = arith.constant 0 : i32
    %c0_i32_1 = arith.constant 0 : i32
    return %2, %c0_i32_0 : i32, i32
  }
  func.func @transform_1(%arg0: i32, %arg1: i32) -> (i32, i32) {
    %c1_i32 = arith.constant 1 : i32
    %0 = arith.muli %arg0, %c1_i32 : i32
    %1 = arith.addi %0, %arg1 : i32
    %c0_i32 = arith.constant 0 : i32
    %2 = arith.minsi %1, %c0_i32 : i32
    %c0_i32_0 = arith.constant 0 : i32
    %c0_i32_1 = arith.constant 0 : i32
    return %2, %c0_i32_0 : i32, i32
  }
  func.func @transform_2(%arg0: i32, %arg1: i32) -> (i32, i32) {
    %c1_i32 = arith.constant 1 : i32
    %0 = arith.muli %arg0, %c1_i32 : i32
    %1 = arith.addi %0, %arg1 : i32
    %c0_i32 = arith.constant 0 : i32
    %2 = arith.minsi %1, %c0_i32 : i32
    %c0_i32_0 = arith.constant 0 : i32
    %c0_i32_1 = arith.constant 0 : i32
    return %2, %c0_i32_0 : i32, i32
  }
  func.func @transform_3(%arg0: i32, %arg1: i32) -> (i32, i32) {
    %c0_i32 = arith.constant 0 : i32
    %c0_i32_0 = arith.constant 0 : i32
    return %arg0, %c0_i32 : i32, i32
  }
}

</mosaic_0001>

<llo_original>
// kernel: tpu_custom_call.1
$region0: #{tpu_custom_call.1}
  #allocation0 [shape = 'u32[]', space=smem, size = 0x4, offset = 0x4, fixed_abs, tag = 'smem constant byte address 0x4 - core index']
  #allocation1 [shape = 'u32[144,128]{1,0:T(1,128)}', space=vmem, size = 0x12000, scoped, tag = 'internal scratch']
  #allocation2 [shape = 'f32[8,1]{1,0:T(8,128)}', space=vmem, size = 0x1000, scoped, tag = 'scratch operand']
  %s0 = inlined_call_operand.vmem [shape: f32[8,32], index: 0, kind: input, shape index: {}]
  %s1 = inlined_call_operand.hbm [shape: f32[8,32], index: 1, kind: input, shape index: {}]
  %s2 = inlined_call_operand.vmem [shape: f32[8,1], index: 2, kind: input, shape index: {}]
  %s3 = inlined_call_operand.hbm [shape: f32[1,1], index: 3, kind: output, shape index: {}]
  %s4 = sld [smem:[#allocation0]]
  $region42: #{tpu_custom_call.1} parent=0
    _
  %s6 = ssub.s32 1, %s4
  %s7 = scalar_select 0, %s6, %s4
  $region1: #{tpu_custom_call.1} parent=0
    #allocation3 [shape = 'u8[4096]{0}', space=vmem, size = 0x1000, scoped, tag = 'input window, operand 1, single buffered']
    #allocation4 [shape = 's32[1]{0}', space=sflag, size = 0x4, scoped, tag = 'scoped memory for tpu_custom_call.1']
    #allocation5 [shape = 's32[1]{0}', space=sflag, size = 0x4, scoped, tag = 'scoped memory for tpu_custom_call.1']
    #allocation6 [shape = 'u8[512]{0}', space=vmem, size = 0x400, scoped, tag = 'output window, operand 0, single buffered']
    %8 = vsyncpa [#allocation4], 0
    %9 = vsyncpa [#allocation5], 0
    // Predicated region
    $region2: #{tpu_custom_call.1} parent=1 // pred_check
      _
    $region3: #{tpu_custom_call.1} parent=1 // pred_check_branch
      %11 = sbr.rel (0) target = $region5
    $region4: #{tpu_custom_call.1} parent=1 // pred_region
      %s12 = sadd.s32 0, 0
      %p13 = scmp.lt.s32.totalorder %s12, 0
      %s14 = scalar_select %p13, %s12, 0
      %p15 = scmp.lt.s32.totalorder %s14, 0
      %s16 = scalar_select %p15, %s14, 0
      %s17 = smul.addr %s16, 8
      %s18 = scalar_lea.vmem %s0, %s17
      %s19 = sadd.s32 0, 0
      %p20 = scmp.lt.s32.totalorder %s19, 0
      %s21 = scalar_select %p20, %s19, 0
    $region5: #{tpu_custom_call.1} parent=1 // pred_fallthru
      _
    // Predicated region
    $region6: #{tpu_custom_call.1} parent=1 // pred_check
      _
    $region7: #{tpu_custom_call.1} parent=1 // pred_check_branch
      %23 = sbr.rel (0) target = $region9
    $region8: #{tpu_custom_call.1} parent=1 // pred_region
      %s24 = sadd.s32 0, 0
      %p25 = scmp.lt.s32.totalorder %s24, 0
      %s26 = scalar_select %p25, %s24, 0
      %s28 = ssub.s32 128, 128
      %29 = vsyncadd [#allocation4], %s28
      %s30 = smul.addr %s26, 128
      %s31 = scalar_lea.hbm %s1, %s30
      %s33 = sshll.u32 [#allocation3], 4
      %s34 = int_to_ptr.vmem [resolvable:$true] %s33
      %36 = dma.hbm_to_vmem [thread:$0]  %s31, 128, %s34, [#allocation4]
    $region9: #{tpu_custom_call.1} parent=1 // pred_fallthru
      _
    // Predicated region
    $region10: #{tpu_custom_call.1} parent=1 // pred_check
      _
    $region11: #{tpu_custom_call.1} parent=1 // pred_check_branch
      %38 = sbr.rel (0) target = $region13
    $region12: #{tpu_custom_call.1} parent=1 // pred_region
      %s39 = sadd.s32 0, 0
      %p40 = scmp.lt.s32.totalorder %s39, 0
      %s41 = scalar_select %p40, %s39, 0
      %p42 = scmp.lt.s32.totalorder %s41, 0
      %s43 = scalar_select %p42, %s41, 0
      %s44 = smul.addr %s43, 8
      %s45 = scalar_lea.vmem %s2, %s44
      %s46 = sadd.s32 0, 0
      %p47 = scmp.lt.s32.totalorder %s46, 0
      %s48 = scalar_select %p47, %s46, 0
    $region13: #{tpu_custom_call.1} parent=1 // pred_fallthru
      _
    // Predicated region
    $region14: #{tpu_custom_call.1} parent=1 // pred_check
      _
    $region15: #{tpu_custom_call.1} parent=1 // pred_check_branch
      %50 = sbr.rel (0) target = $region17
    $region16: #{tpu_custom_call.1} parent=1 // pred_region
      %51 = dma.done [#allocation4], 128
    $region17: #{tpu_custom_call.1} parent=1 // pred_fallthru
      _
    %s52 = sadd.s32 0, 0
    %p53 = scmp.lt.s32.totalorder %s52, 0
    %s54 = scalar_select %p53, %s52, 0
    %p55 = scmp.lt.s32.totalorder %s54, 0
    %s56 = scalar_select %p55, %s54, 0
    %s57 = smul.addr %s56, 8
    %s58 = scalar_lea.vmem %s0, %s57
    %s59 = sadd.s32 0, 0
    %p60 = scmp.lt.s32.totalorder %s59, 0
    %s61 = scalar_select %p60, %s59, 0
    %p62 = scmp.lt.s32.totalorder %s61, 0
    %s63 = scalar_select %p62, %s61, 0
    %s64 = smul.addr %s63, 8
    %s65 = scalar_lea.vmem %s2, %s64
    %s66 = sadd.s32 0, 0
    %p67 = scmp.lt.s32.totalorder %s66, 0
    %s68 = scalar_select %p67, %s66, 0
    %p69 = scmp.lt.s32.totalorder %s68, 0
    %s70 = scalar_select %p69, %s68, 0
    %s71 = smul.addr %s70, 8
    %s72 = scalar_lea.vmem %s0, %s71
    %s73 = sadd.s32 0, 0
    %p74 = scmp.lt.s32.totalorder %s73, 0
    %s75 = scalar_select %p74, %s73, 0
    %s76 = sadd.s32 0, 0
    %p77 = scmp.lt.s32.totalorder %s76, 0
    %s78 = scalar_select %p77, %s76, 0
    %s79 = sadd.s32 0, 0
    %p80 = scmp.lt.s32.totalorder %s79, 0
    %s81 = scalar_select %p80, %s79, 0
    %p82 = scmp.lt.s32.totalorder %s81, 0
    %s83 = scalar_select %p82, %s81, 0
    %s84 = smul.addr %s83, 8
    %s85 = scalar_lea.vmem %s2, %s84
    %s86 = sadd.s32 0, 0
    %p87 = scmp.lt.s32.totalorder %s86, 0
    %s88 = scalar_select %p87, %s86, 0
    %p89 = scmp.eq.s32.totalorder 0, 0
    // Predicated region
    $region18: #{tpu_custom_call.1} parent=1 // pred_check
      %p90 = pneg %p89
    $region19: #{tpu_custom_call.1} parent=1 // pred_check_branch
      %92 = sbr.rel (%p90) target = $region21
    $region20: #{tpu_custom_call.1} parent=1 // pred_region
      %vm93 = vcmask 7168
      %94 = vst.msk [vmem:[#allocation2] sm:$0xff] %vm93, 0.0
    $region21: #{tpu_custom_call.1} parent=1 // pred_fallthru
      _
    %v95 = vld [vmem:[%s72] sm:$0xff]
    %v96 = vld [vmem:[#allocation3] sm:$0xff]
    %v97 = vsub.f32 %v95, %v96
    %v98 = vmul.f32 %v97, %v97
    %vm99 = vcmask 261120
    %v100 = vsel %vm99, %v98, 0.0
    %101 = vadd.xlane.f32.xlu0 %v100
    %v102 = vpop.xlane.xlu0 %101
    %v103 = vld [vmem:[%s85] sm:$0xff]
    %v104 = vsub.f32 2.0, %v102
    %v105 = vmax.f32 %v104, 0.0
    %v106 = vsub.f32 1.0, %v103
    %v107 = vmul.f32 %v106, %v102
    %v108 = vmul.f32 %v103, %v105
    %v109 = vadd.f32 %v107, %v108
    %s110 = sadd.s32 0, 0
    %s111 = sadd.s32 %s110, 1
    %s112 = smul.u32 %s111, 8
    %p113 = scmp.gt.s32.totalorder %s112, 8
    %p114 = scmp.le.s32.totalorder %s112, 8
    // Predicated region
    $region22: #{tpu_custom_call.1} parent=1 // pred_check
      %p115 = pneg %p114
    $region23: #{tpu_custom_call.1} parent=1 // pred_check_branch
      %117 = sbr.rel (%p115) target = $region25
    $region24: #{tpu_custom_call.1} parent=1 // pred_region
      %v118 = vld [vmem:[#allocation2] sm:$0xff]
      %v119 = vadd.f32 %v118, %v109
      %vm120 = vcmask 7168
      %121 = vst.msk [vmem:[#allocation2] sm:$0xff] %vm120, %v119
    $region25: #{tpu_custom_call.1} parent=1 // pred_fallthru
      _
    // Predicated region
    $region26: #{tpu_custom_call.1} parent=1 // pred_check
      %p122 = pneg %p113
    $region27: #{tpu_custom_call.1} parent=1 // pred_check_branch
      %124 = sbr.rel (%p122) target = $region29
    $region28: #{tpu_custom_call.1} parent=1 // pred_region
      %s125 = smul.u32 %s110, 8
      %v126 = vlaneseq
      %v127 = vshrl.u32 %v126, 7
      %v128 = vstv %s125
      %v129 = vadd.s32 %v128, %v127
      %v130 = vld [vmem:[#allocation2] sm:$0xff]
      %vm131 = vcmp.lt.s32.totalorder %v129, 8
      %v132 = vsel %vm131, %v109, 0.0
      %v133 = vadd.f32 %v130, %v132
      %vm134 = vcmask 7168
      %135 = vst.msk [vmem:[#allocation2] sm:$0xff] %vm134, %v133
    $region29: #{tpu_custom_call.1} parent=1 // pred_fallthru
      _
    // Predicated region
    $region30: #{tpu_custom_call.1} parent=1 // pred_check
      %p136 = pneg %p89
    $region31: #{tpu_custom_call.1} parent=1 // pred_check_branch
      %138 = sbr.rel (%p136) target = $region33
    $region32: #{tpu_custom_call.1} parent=1 // pred_region
      %v139 = vld [vmem:[#allocation2] sm:$0xff]
      %vm140 = vcmask 7168
      %v141 = vsel %vm140, %v139, 0.0
      %142 = vadd.xlane.f32.xlu0 %v141
      %v143 = vpop.xlane.xlu0 %142
      %v144 = vrot.slane %v143, 4
      %v145 = vadd.f32 %v143, %v144
      %v146 = vrot.slane %v145, 2
      %v147 = vadd.f32 %v145, %v146
      %v148 = vrot.slane %v147, 1
      %v149 = vadd.f32 %v147, %v148
      %s150 = vtos %v149
      %v151 = vstv %s150
      %vm152 = vcmask 0
      %153 = vst.msk [vmem:[#allocation6] sm:$0x1] %vm152, %v151
    $region33: #{tpu_custom_call.1} parent=1 // pred_fallthru
      _
    // Predicated region
    $region34: #{tpu_custom_call.1} parent=1 // pred_check
      _
    $region35: #{tpu_custom_call.1} parent=1 // pred_check_branch
      %155 = sbr.rel (0) target = $region37
    $region36: #{tpu_custom_call.1} parent=1 // pred_region
      %s157 = ssub.s32 16, 16
      %158 = vsyncadd [#allocation5], %s157
      %s160 = sshll.u32 [#allocation6], 4
      %s161 = int_to_ptr.vmem [resolvable:$true] %s160
      %163 = dma.vmem_to_hbm [thread:$0]  %s161, 16, %s3, [#allocation5]
    $region37: #{tpu_custom_call.1} parent=1 // pred_fallthru
      _
    // Predicated region
    $region38: #{tpu_custom_call.1} parent=1 // pred_check
      _
    $region39: #{tpu_custom_call.1} parent=1 // pred_check_branch
      %165 = sbr.rel (0) target = $region41
    $region40: #{tpu_custom_call.1} parent=1 // pred_region
      %166 = dma.done [#allocation5], 16
    $region41: #{tpu_custom_call.1} parent=1 // pred_fallthru
      _
    %167 = vsyncpa [#allocation4], 1
    %168 = vsyncpa [#allocation5], 1

</llo_original>
